<compile_context>
chip_gen: v7x
topology: tpu7x:2x2x1
jax: 0.10.0
libtpu: 0.0.40
codegen_flags: <defaults>
</compile_context>

<pallas_src>
import math
import functools

import jax
import jax.numpy as jnp
from jax import lax
from jax.experimental import pallas as pl
from jax.experimental.pallas import tpu as pltpu


def _round_up(v, m):
    return ((v + m - 1) // m) * m


def _largest_tile(padded, cap, unit=128):
    """Largest multiple of `unit` that divides `padded` and is <= cap."""
    n_units = padded // unit
    max_units = max(1, cap // unit)
    for d in range(min(n_units, max_units), 0, -1):
        if n_units % d == 0:
            return d * unit
    return unit


# ----------------------------------------------------------------------------
# Kernels
# ----------------------------------------------------------------------------
def _equal_linear_kernel_fused_k(x_ref, w_ref, b_ref, o_ref, *,
                                 scale, use_activation, negative_slope, act_gain):
    # Whole reduction in one MXU pass: no accumulator scratch, no phases.
    acc = lax.dot_general(
        x_ref[...], w_ref[...],
        dimension_numbers=(((1,), (1,)), ((), ())),   # NT: contract lane dims
        preferred_element_type=jnp.float32)
    h = acc * scale + b_ref[...]
    if use_activation:
        h = jnp.where(h >= 0.0, h, h * negative_slope) * act_gain
    o_ref[...] = h.astype(o_ref.dtype)


def _equal_linear_kernel_multi_k(x_ref, w_ref, b_ref, o_ref, acc_ref, *,
                                 scale, use_activation, negative_slope, act_gain):
    k = pl.program_id(2)

    @pl.when(k == 0)
    def _():
        acc_ref[...] = jnp.zeros_like(acc_ref)

    acc_ref[...] += lax.dot_general(
        x_ref[...], w_ref[...],
        dimension_numbers=(((1,), (1,)), ((), ())),
        preferred_element_type=jnp.float32)

    @pl.when(k == pl.num_programs(2) - 1)
    def _():
        h = acc_ref[...] * scale + b_ref[...]
        if use_activation:
            h = jnp.where(h >= 0.0, h, h * negative_slope) * act_gain
        o_ref[...] = h.astype(o_ref.dtype)


# ----------------------------------------------------------------------------
# "Module init": pad + cast the weight exactly once, fold lr_mul into the bias.
# ----------------------------------------------------------------------------
def prepare_equal_linear_params(weight, bias, *, lr_mul=1.0,
                                param_dtype=jnp.bfloat16,
                                tn_max=256, tk_max=1024):
    """Pre-pad/pre-cast EqualLinear parameters. Call once, reuse every step."""
    out_dim, in_dim = weight.shape
    Np = _round_up(out_dim, 128)
    Kp = _round_up(in_dim, 128)
    tn = _largest_tile(Np, tn_max)   # >=2 N blocks for out_dim >= 2*tn_max (v7x)
    tk = _largest_tile(Kp, tk_max)   # tk == Kp for in_dim <= tk_max -> fused K

    wp = weight
    if (Np, Kp) != (out_dim, in_dim):
        wp = jnp.pad(wp, ((0, Np - out_dim), (0, Kp - in_dim)))
    wp = wp.astype(param_dtype)      # bf16 by default: half the HBM bytes

    bp = (bias * lr_mul).astype(jnp.float32)
    if Np != out_dim:
        bp = jnp.pad(bp, (0, Np - out_dim))
    bp = bp.reshape(1, Np)

    return dict(weight=wp, bias=bp, out_dim=out_dim, in_dim=in_dim,
                tn=tn, tk=tk, scale=(1.0 / math.sqrt(in_dim)) * lr_mul,
                param_dtype=param_dtype)


# ----------------------------------------------------------------------------
# Per-call forward
# ----------------------------------------------------------------------------
def equal_linear(x, params, *, activation=None, tm_max=512):
    """EqualLinear.forward on pre-prepared params.  x: (B, in_dim)."""
    B, in_dim = x.shape
    assert in_dim == params["in_dim"], "in_dim mismatch with prepared params"
    out_dim = params["out_dim"]
    wp, bp = params["weight"], params["bias"]
    Np, Kp = wp.shape
    tn, tk = params["tn"], params["tk"]
    scale = params["scale"]
    mxu_dtype = params["param_dtype"]
    out_dtype = x.dtype

    # Sublane packing multiple for the MXU input dtype: 8 f32 / 16 bf16 / 32 int8-fp8.
    itemsize = jnp.dtype(mxu_dtype).itemsize
    m_mult = 8 * max(1, 4 // itemsize)

    Mp = _round_up(B, m_mult)
    if Mp <= tm_max:
        tm = Mp                       # whole batch in one M block -> weight read once
    else:
        tm = _round_up(tm_max, m_mult)
        Mp = _round_up(B, tm)

    xp = x
    if (Mp, Kp) != (B, in_dim):
        xp = jnp.pad(xp, ((0, Mp - B), (0, Kp - in_dim)))
    xp = xp.astype(mxu_dtype)         # x is tiny; casting per call is cheap

    common = dict(scale=scale, use_activation=(activation is not None),
                  negative_slope=0.2, act_gain=math.sqrt(2.0))
    n_k = Kp // tk

    if n_k == 1:
        # Single-K-step fast path: 2-D grid, no accumulator scratch.
        out = pl.pallas_call(
            functools.partial(_equal_linear_kernel_fused_k, **common),
            out_shape=jax.ShapeDtypeStruct((Mp, Np), out_dtype),
            grid_spec=pltpu.PrefetchScalarGridSpec(
                num_scalar_prefetch=0,
                grid=(Mp // tm, Np // tn),
                in_specs=[
                    pl.BlockSpec((tm, tk), lambda i, j: (i, 0)),   # x
                    pl.BlockSpec((tn, tk), lambda i, j: (j, 0)),   # weight (pre-cast)
                    pl.BlockSpec((1, tn), lambda i, j: (0, j)),    # bias*lr_mul
                ],
                out_specs=pl.BlockSpec((tm, tn), lambda i, j: (i, j)),
            ),
            compiler_params=pltpu.CompilerParams(
                dimension_semantics=("parallel", "parallel")),
        )(xp, wp, bp)
    else:
        # Large in_dim: K-reduction with a resident f32 accumulator.
        out = pl.pallas_call(
            functools.partial(_equal_linear_kernel_multi_k, **common),
            out_shape=jax.ShapeDtypeStruct((Mp, Np), out_dtype),
            grid_spec=pltpu.PrefetchScalarGridSpec(
                num_scalar_prefetch=0,
                grid=(Mp // tm, Np // tn, n_k),
                in_specs=[
                    pl.BlockSpec((tm, tk), lambda i, j, k: (i, k)),
                    pl.BlockSpec((tn, tk), lambda i, j, k: (j, k)),
                    pl.BlockSpec((1, tn), lambda i, j, k: (0, j)),
                ],
                out_specs=pl.BlockSpec((tm, tn), lambda i, j, k: (i, j)),
                scratch_shapes=[pltpu.VMEM((tm, tn), jnp.float32)],
            ),
            compiler_params=pltpu.CompilerParams(
                dimension_semantics=("parallel", "parallel", "arbitrary")),
        )(xp, wp, bp)

    if Mp != B or Np != out_dim:
        out = out[:B, :out_dim]
    return out


# ----------------------------------------------------------------------------
# Pure-JAX reference (matches the PyTorch forward exactly)
# ----------------------------------------------------------------------------
def _reference(x, weight, bias, *, lr_mul=1.0, activation=None):
    in_dim = x.shape[-1]
    scale = (1.0 / math.sqrt(in_dim)) * lr_mul
    out = x @ (weight * scale).T + bias * lr_mul
    if activation is not None:
        out = jnp.where(out >= 0, out, out * 0.2) * math.sqrt(2.0)
    return out


if __name__ == "__main__":
    key = jax.random.PRNGKey(0)
    k_x, k_w, k_w2 = jax.random.split(key, 3)

    # Small EqualLinear-head shapes (scaled-down Encoder fc heads).
    batch, in_dim, out_dim = 4, 256, 384
    lr_mul, bias_init = 0.01, 0.0

    x = jax.random.normal(k_x, (batch, in_dim), dtype=jnp.float32)
    weight = jax.random.normal(k_w, (out_dim, in_dim), dtype=jnp.float32) / lr_mul
    bias = jnp.full((out_dim,), bias_init, dtype=jnp.float32)

    ref_lin = _reference(x, weight, bias, lr_mul=lr_mul, activation=None)
    ref_act = _reference(x, weight, bias, lr_mul=lr_mul, activation="fused_lrelu")

    # --- Exact f32-param path (tight tolerance); K collapses to one MXU pass. ---
    params_f32 = prepare_equal_linear_params(weight, bias, lr_mul=lr_mul,
                                             param_dtype=jnp.float32)
    out_lin = jax.block_until_ready(equal_linear(x, params_f32, activation=None))
    out_act = jax.block_until_ready(
        equal_linear(x, params_f32, activation="fused_lrelu"))
    assert out_lin.shape == (batch, out_dim)
    assert out_act.shape == (batch, out_dim)
    assert jnp.allclose(out_lin, ref_lin, atol=1e-3, rtol=1e-4)
    assert jnp.allclose(out_act, ref_act, atol=1e-3, rtol=1e-4)

    # --- Default bf16-weight path (pre-cast once, half the weight HBM bytes). ---
    params_bf16 = prepare_equal_linear_params(weight, bias, lr_mul=lr_mul)
    out_bf = jax.block_until_ready(
        equal_linear(x, params_bf16, activation="fused_lrelu"))
    assert jnp.allclose(out_bf, ref_act, atol=0.15, rtol=3e-2)

    # --- Multi-K-step path (tk forced small so the reduction kernel runs). ---
    params_mk = prepare_equal_linear_params(weight, bias, lr_mul=lr_mul,
                                            param_dtype=jnp.float32, tk_max=128)
    out_mk = jax.block_until_ready(
        equal_linear(x, params_mk, activation="fused_lrelu"))
    assert jnp.allclose(out_mk, ref_act, atol=1e-3, rtol=1e-4)

    # --- Non-128-aligned out_dim exercises N padding + output slice. ---
    out_dim2 = 200
    w2 = jax.random.normal(k_w2, (out_dim2, in_dim), dtype=jnp.float32) / lr_mul
    b2 = jnp.full((out_dim2,), 0.3, dtype=jnp.float32)
    params2 = prepare_equal_linear_params(w2, b2, lr_mul=lr_mul,
                                          param_dtype=jnp.float32)
    out2 = jax.block_until_ready(equal_linear(x, params2, activation=None))
    ref2 = _reference(x, w2, b2, lr_mul=lr_mul, activation=None)
    assert out2.shape == (batch, out_dim2)
    assert jnp.allclose(out2, ref2, atol=1e-3, rtol=1e-4)

    print("KERNEL_OK")
</pallas_src>

<mosaic_0001>
module attributes {stable_mosaic.version = 11 : i64} {
  func.func @_equal_linear_kernel_fused_k(%arg0: i32, %arg1: i32, %arg2: memref<8x256xf32, #tpu.memory_space<vmem>>, %arg3: memref<128x256xf32, #tpu.memory_space<vmem>>, %arg4: memref<1x128xf32, #tpu.memory_space<vmem>>, %arg5: memref<8x128xf32, #tpu.memory_space<vmem>>) attributes {dimension_semantics = [#tpu.dimension_semantics<parallel>, #tpu.dimension_semantics<parallel>], iteration_bounds = array<i64: 1, 3>, scalar_prefetch = 0 : i64, scratch_operands = 0 : i64, tpu.core_type = #tpu.core_type<tc>, window_params = [{transform_indices = @transform_0, window_bounds = array<i64: 8, 256>}, {transform_indices = @transform_1, window_bounds = array<i64: 128, 256>}, {transform_indices = @transform_2, window_bounds = array<i64: 1, 128>}, {transform_indices = @transform_3, window_bounds = array<i64: 8, 128>}]} {
    %c0 = arith.constant 0 : index
    %c0_0 = arith.constant 0 : index
    %0 = vector.load %arg2[%c0, %c0_0] : memref<8x256xf32, #tpu.memory_space<vmem>>, vector<8x256xf32>
    %c0_1 = arith.constant 0 : index
    %c0_2 = arith.constant 0 : index
    %1 = vector.load %arg3[%c0_1, %c0_2] : memref<128x256xf32, #tpu.memory_space<vmem>>, vector<128x256xf32>
    %cst = arith.constant dense<0.000000e+00> : vector<8x128xf32>
    %2 = tpu.matmul %0, %1, %cst {dimension_numbers = #tpu.dot_dimension_numbers<[1], [1], [0], [0], [0, 0, 1, 0], [], []>} : vector<8x256xf32>, vector<128x256xf32>, vector<8x128xf32> -> vector<8x128xf32>
    %cst_3 = arith.constant 6.250000e-04 : f32
    %3 = vector.broadcast %cst_3 : f32 to vector<8x128xf32>
    %4 = arith.mulf %2, %3 : vector<8x128xf32>
    %c0_4 = arith.constant 0 : index
    %c0_5 = arith.constant 0 : index
    %5 = vector.load %arg4[%c0_4, %c0_5] : memref<1x128xf32, #tpu.memory_space<vmem>>, vector<1x128xf32>
    %6 = vector.broadcast %5 : vector<1x128xf32> to vector<8x128xf32>
    %7 = arith.addf %4, %6 : vector<8x128xf32>
    %c0_6 = arith.constant 0 : index
    %c0_7 = arith.constant 0 : index
    %8 = vector.load %arg5[%c0_6, %c0_7] : memref<8x128xf32, #tpu.memory_space<vmem>>, vector<8x128xf32>
    tpu.vector_store %arg5[%c0_6, %c0_7], %7 {strides = array<i32>} : memref<8x128xf32, #tpu.memory_space<vmem>>, vector<8x128xf32>,
    return
  }
  func.func @transform_0(%arg0: i32, %arg1: i32) -> (i32, i32) {
    %c0_i32 = arith.constant 0 : i32
    %c0_i32_0 = arith.constant 0 : i32
    return %arg0, %c0_i32 : i32, i32
  }
  func.func @transform_1(%arg0: i32, %arg1: i32) -> (i32, i32) {
    %c0_i32 = arith.constant 0 : i32
    %c0_i32_0 = arith.constant 0 : i32
    return %arg1, %c0_i32 : i32, i32
  }
  func.func @transform_2(%arg0: i32, %arg1: i32) -> (i32, i32) {
    %c0_i32 = arith.constant 0 : i32
    %c0_i32_0 = arith.constant 0 : i32
    return %c0_i32, %arg1 : i32, i32
  }
  func.func @transform_3(%arg0: i32, %arg1: i32) -> (i32, i32) {
    %c0_i32 = arith.constant 0 : i32
    return %arg0, %arg1 : i32, i32
  }
}

</mosaic_0001>

<llo_original>
// kernel: tpu_custom_call.1
$region0: #{tpu_custom_call.1}
  #allocation0 [shape = 'u32[]', space=smem, size = 0x4, offset = 0x4, fixed_abs, tag = 'smem constant byte address 0x4 - core index']
  #allocation1 [shape = 'u32[144,128]{1,0:T(1,128)}', space=vmem, size = 0x12000, scoped, tag = 'internal scratch']
  %s0 = inlined_call_operand.hbm [shape: f32[8,256], index: 0, kind: input, shape index: {}]
  %s1 = inlined_call_operand.hbm [shape: f32[384,256], index: 1, kind: input, shape index: {}]
  %s2 = inlined_call_operand.vmem [shape: f32[1,384], index: 2, kind: input, shape index: {}]
  %s3 = inlined_call_operand.hbm [shape: f32[8,384], index: 3, kind: output, shape index: {}]
  %s4 = sld [smem:[#allocation0]]
  $region53: #{tpu_custom_call.1} parent=0
    _
  %s6 = ssub.s32 1, %s4
  %s7 = scalar_select 0, %s6, %s4
  $region1: #{tpu_custom_call.1} parent=0
    #allocation2 [shape = 'u8[8192]{0}', space=vmem, size = 0x2000, scoped, tag = 'input window, operand 0, single buffered']
    #allocation3 [shape = 's32[2]{0}', space=sflag, size = 0x8, scoped, tag = 'scoped memory for tpu_custom_call.1']
    #allocation4 [shape = 's32[2]{0}', space=sflag, size = 0x8, scoped, tag = 'scoped memory for tpu_custom_call.1']
    #allocation5 [shape = 'u8[262144]{0}', space=vmem, size = 0x40000, scoped, tag = 'input window, operand 1']
    #allocation6 [shape = 's32[2]{0}', space=sflag, size = 0x8, scoped, tag = 'scoped memory for tpu_custom_call.1']
    #allocation7 [shape = 'u8[8192]{0}', space=vmem, size = 0x2000, scoped, tag = 'output window, operand 0']
    %8 = vsyncpa [#allocation3], 0
    %9 = vsyncpa [#allocation6], 0
    %s10 = scalar_lea.sflag [#allocation6], 1
    %11 = vsyncpa %s10, 0
    %12 = vsyncpa [#allocation4], 0
    %s13 = scalar_lea.sflag [#allocation4], 1
    %14 = vsyncpa %s13, 0
    loop: start=0, step=1, limit=5
    $region2: #{tpu_custom_call.1} parent=1 // loop_pre_header
      _
    $region3: #{tpu_custom_call.1} parent=1 // loop_header
      %s16 = sphi 0, %s20
      %p17 = scmp.ge.s32.totalorder %s16, 5
      %s23 = sphi 0, %s35
      %s24 = sphi 0, %s31
      %s25 = sphi 0, %s23
      %s26 = sphi 0, %s24
      %s27 = sphi 0, %s25
      %s28 = sphi 0, %s26
      %s38 = sphi 0, %s40
      %s41 = sphi 0, %s38
      %s42 = sphi 0, %s41
      %s58 = sphi 0, %s42
      %s64 = sphi 0, %s66
      %s67 = sphi 0, %s64
      %s68 = sphi 0, %s67
      %s84 = sphi 0, %s68
      %s90 = sphi 0, %s92
      %s93 = sphi 0, %s90
      %s94 = sphi 0, %s93
      %s110 = sphi 0, %s94
      %s118 = sphi 0, %s120
      %s121 = sphi 0, %s118
      %s122 = sphi 0, %s121
      %s138 = sphi 0, %s122
    $region4: #{tpu_custom_call.1} parent=1 // loop_header_branch
      %19 = sbr.rel (%p17) target = $region8
    $region5: #{tpu_custom_call.1} parent=1 // loop_body
      %s21 = ssub.s32 %s16, 1
      %s22 = ssub.s32 %s16, 2
      %s29 = sadd.s32 1, %s24
      %p30 = scmp.ge.s32.totalorder %s29, 3
      %s31 = scalar_select %p30, 0, %s29
      %s32 = sadd.s32 1, %s23
      %s33 = scalar_select %p30, %s32, %s23
      %p34 = scmp.ge.s32.totalorder %s33, 1
      %s35 = scalar_select %p34, 0, %s33
      %s36 = ssub.s32 %s23, %s35
      %p37 = scmp.eq.s32.totalorder %s36, 0
      %s39 = sadd.s32 %s38, 1
      %s40 = scalar_select %p37, %s38, %s39
      %p43 = pneg %p37
      %p44 = scmp.eq.s32.totalorder %s16, 2
      %p45 = por %p43, %p44
      %p46 = scmp.ne.s32.totalorder %s38, %s41
      %p47 = scmp.eq.s32.totalorder %s16, 0
      %p48 = por %p46, %p47
      %p49 = scmp.ne.s32.totalorder %s38, %s41
      %p50 = scmp.eq.s32.totalorder %s21, 2
      %p51 = por %p49, %p50
      %p52 = scmp.ne.s32.totalorder %s41, %s42
      %p53 = scmp.eq.s32.totalorder %s21, 0
      %p54 = por %p52, %p53
      %p55 = scmp.ne.s32.totalorder %s41, %s42
      %p56 = scmp.eq.s32.totalorder %s22, 2
      %p57 = por %p55, %p56
      %p59 = scmp.ne.s32.totalorder %s42, %s58
      %p60 = scmp.eq.s32.totalorder %s22, 0
      %p61 = por %p59, %p60
      %s62 = ssub.s32 %s24, %s31
      %p63 = scmp.eq.s32.totalorder %s62, 0
      %s65 = sadd.s32 %s64, 1
      %s66 = scalar_select %p63, %s64, %s65
      %p69 = pneg %p63
      %p70 = scmp.eq.s32.totalorder %s16, 2
      %p71 = por %p69, %p70
      %p72 = scmp.ne.s32.totalorder %s64, %s67
      %p73 = scmp.eq.s32.totalorder %s16, 0
      %p74 = por %p72, %p73
      %p75 = scmp.ne.s32.totalorder %s64, %s67
      %p76 = scmp.eq.s32.totalorder %s21, 2
      %p77 = por %p75, %p76
      %p78 = scmp.ne.s32.totalorder %s67, %s68
      %p79 = scmp.eq.s32.totalorder %s21, 0
      %p80 = por %p78, %p79
      %p81 = scmp.ne.s32.totalorder %s67, %s68
      %p82 = scmp.eq.s32.totalorder %s22, 2
      %p83 = por %p81, %p82
      %p85 = scmp.ne.s32.totalorder %s68, %s84
      %p86 = scmp.eq.s32.totalorder %s22, 0
      %p87 = por %p85, %p86
      %s88 = ssub.s32 %s24, %s31
      %p89 = scmp.eq.s32.totalorder %s88, 0
      %s91 = sadd.s32 %s90, 1
      %s92 = scalar_select %p89, %s90, %s91
      %p95 = pneg %p89
      %p96 = scmp.eq.s32.totalorder %s16, 2
      %p97 = por %p95, %p96
      %p98 = scmp.ne.s32.totalorder %s90, %s93
      %p99 = scmp.eq.s32.totalorder %s16, 0
      %p100 = por %p98, %p99
      %p101 = scmp.ne.s32.totalorder %s90, %s93
      %p102 = scmp.eq.s32.totalorder %s21, 2
      %p103 = por %p101, %p102
      %p104 = scmp.ne.s32.totalorder %s93, %s94
      %p105 = scmp.eq.s32.totalorder %s21, 0
      %p106 = por %p104, %p105
      %p107 = scmp.ne.s32.totalorder %s93, %s94
      %p108 = scmp.eq.s32.totalorder %s22, 2
      %p109 = por %p107, %p108
      %p111 = scmp.ne.s32.totalorder %s94, %s110
      %p112 = scmp.eq.s32.totalorder %s22, 0
      %p113 = por %p111, %p112
      %s114 = ssub.s32 %s23, %s35
      %s115 = ssub.s32 %s24, %s31
      %s116 = sor.u32 %s114, %s115
      %p117 = scmp.eq.s32.totalorder %s116, 0
      %s119 = sadd.s32 %s118, 1
      %s120 = scalar_select %p117, %s118, %s119
      %p123 = pneg %p117
      %p124 = scmp.eq.s32.totalorder %s16, 2
      %p125 = por %p123, %p124
      %p126 = scmp.ne.s32.totalorder %s118, %s121
      %p127 = scmp.eq.s32.totalorder %s16, 0
      %p128 = por %p126, %p127
      %p129 = scmp.ne.s32.totalorder %s118, %s121
      %p130 = scmp.eq.s32.totalorder %s21, 2
      %p131 = por %p129, %p130
      %p132 = scmp.ne.s32.totalorder %s121, %s122
      %p133 = scmp.eq.s32.totalorder %s21, 0
      %p134 = por %p132, %p133
      %p135 = scmp.ne.s32.totalorder %s121, %s122
      %p136 = scmp.eq.s32.totalorder %s22, 2
      %p137 = por %p135, %p136
      %p139 = scmp.ne.s32.totalorder %s122, %s138
      %p140 = scmp.eq.s32.totalorder %s22, 0
      %p141 = por %p139, %p140
      %p142 = scmp.le.s32.totalorder 1, %s16
      %p143 = scmp.lt.s32.totalorder %s16, 4
      %p144 = pnand %p142, %p143
      %p145 = pneg %p144
      // Predicated region
      $region9: #{tpu_custom_call.1} parent=5 // pred_check
        _
      $region10: #{tpu_custom_call.1} parent=5 // pred_check_branch
        %147 = sbr.rel (%p144) target = $region12
      $region11: #{tpu_custom_call.1} parent=5 // pred_region
        %s148 = ssub.s32 %s16, 1
        // Predicated region
        $region13: #{tpu_custom_call.1} parent=11 // pred_check
          %p149 = pneg %p54
        $region14: #{tpu_custom_call.1} parent=11 // pred_check_branch
          %151 = sbr.rel (%p149) target = $region16
        $region15: #{tpu_custom_call.1} parent=11 // pred_region
          %s153 = ssub.s32 256, 256
          %154 = vsyncadd [#allocation3], %s153
          %s155 = smul.addr %s25, 2
          %s156 = smul.addr %s155, 128
          %s157 = scalar_lea.hbm %s0, %s156
          %s159 = sshll.u32 [#allocation2], 4
          %s160 = int_to_ptr.vmem [resolvable:$true] %s159
          %162 = dma.hbm_to_vmem [thread:$0]  %s157, 256, %s160, [#allocation3]
        $region16: #{tpu_custom_call.1} parent=11 // pred_fallthru
          _
      $region12: #{tpu_custom_call.1} parent=5 // pred_fallthru
        _
      %p163 = scmp.lt.s32.totalorder %s16, 3
      // Predicated region
      $region17: #{tpu_custom_call.1} parent=5 // pred_check
        %p164 = pneg %p163
      $region18: #{tpu_custom_call.1} parent=5 // pred_check_branch
        %166 = sbr.rel (%p164) target = $region20
      $region19: #{tpu_custom_call.1} parent=5 // pred_region
        // Predicated region
        $region21: #{tpu_custom_call.1} parent=19 // pred_check
          %p167 = pneg %p74
        $region22: #{tpu_custom_call.1} parent=19 // pred_check_branch
          %169 = sbr.rel (%p167) target = $region24
        $region23: #{tpu_custom_call.1} parent=19 // pred_region
          %s170 = sand.u32 %s64, 1
          %s171 = scalar_lea.sflag [#allocation6], %s170
          %s172 = sand.u32 %s64, 1
          %s173 = smul.addr %s172, 256
          %s174 = scalar_lea.vmem [#allocation5], %s173
          %s175 = smul.u32 16, %s24
          %s177 = ssub.s32 4096, 4096
          %178 = vsyncadd %s171, %s177
          %s179 = smul.addr %s175, 2
          %s180 = smul.addr %s179, 128
          %s181 = scalar_lea.hbm %s1, %s180
          %s182 = sshll.u32 %s174, 4
          %s183 = int_to_ptr.vmem [resolvable:$true] %s182
          %188 = dma.hbm_to_vmem [thread:$0]  %s181, 4096, %s183, %s171, 256, 256, 16
        $region24: #{tpu_custom_call.1} parent=19 // pred_fallthru
          _
        // Predicated region
        $region25: #{tpu_custom_call.1} parent=19 // pred_check
          %p189 = pneg %p100
        $region26: #{tpu_custom_call.1} parent=19 // pred_check_branch
          %191 = sbr.rel (%p189) target = $region28
        $region27: #{tpu_custom_call.1} parent=19 // pred_region
          %p192 = scmp.lt.s32.totalorder %s24, 2
          %s193 = scalar_select %p192, %s24, 2
          %s194 = scalar_lea.vmem %s2, %s193
        $region28: #{tpu_custom_call.1} parent=19 // pred_fallthru
          _
      $region20: #{tpu_custom_call.1} parent=5 // pred_fallthru
        _
      %p195 = scmp.le.s32.totalorder 1, %s16
      %p196 = scmp.lt.s32.totalorder %s16, 4
      %p197 = pnand %p195, %p196
      %p198 = pneg %p197
      // Predicated region
      $region29: #{tpu_custom_call.1} parent=5 // pred_check
        _
      $region30: #{tpu_custom_call.1} parent=5 // pred_check_branch
        %200 = sbr.rel (%p197) target = $region32
      $region31: #{tpu_custom_call.1} parent=5 // pred_region
        %s201 = ssub.s32 %s16, 1
        // Predicated region
        $region33: #{tpu_custom_call.1} parent=31 // pred_check
          %p202 = pneg %p54
        $region34: #{tpu_custom_call.1} parent=31 // pred_check_branch
          %204 = sbr.rel (%p202) target = $region36
        $region35: #{tpu_custom_call.1} parent=31 // pred_region
          %205 = dma.done [#allocation3], 256
        $region36: #{tpu_custom_call.1} parent=31 // pred_fallthru
          _
        %s206 = sand.u32 %s67, 1
        %s207 = scalar_lea.sflag [#allocation6], %s206
        %s208 = sand.u32 %s67, 1
        %s209 = smul.addr %s208, 256
        %s210 = scalar_lea.vmem [#allocation5], %s209
        // Predicated region
        $region37: #{tpu_custom_call.1} parent=31 // pred_check
          %p211 = pneg %p80
        $region38: #{tpu_custom_call.1} parent=31 // pred_check_branch
          %213 = sbr.rel (%p211) target = $region40
        $region39: #{tpu_custom_call.1} parent=31 // pred_region
          %214 = dma.done %s207, 4096
        $region40: #{tpu_custom_call.1} parent=31 // pred_fallthru
          _
        %p215 = pneg %p54
        %p216 = pneg %p51
        %s217 = sand.u32 %s67, 1
        %s218 = scalar_lea.sflag [#allocation6], %s217
        %s219 = sand.u32 %s67, 1
        %s220 = smul.addr %s219, 256
        %s221 = scalar_lea.vmem [#allocation5], %s220
        %p222 = pneg %p80
        %p223 = pneg %p77
        %p224 = scmp.lt.s32.totalorder %s26, 2
        %s225 = scalar_select %p224, %s26, 2
        %s226 = scalar_lea.vmem %s2, %s225
        %p227 = pneg %p106
        %p228 = pneg %p103
        %p229 = pneg %p134
        %p230 = pneg %p131
        %s231 = sand.u32 %s121, 1
        %s232 = scalar_lea.sflag [#allocation4], %s231
        %s233 = sand.u32 %s121, 1
        %s234 = smul.addr %s233, 8
        %s235 = scalar_lea.vmem [#allocation7], %s234
        %s236 = smul.u32 16, %s26
        %p237 = scmp.lt.s32.totalorder %s26, 2
        %s238 = scalar_select %p237, %s26, 2
        %s239 = scalar_lea.vmem %s2, %s238
        %v240 = vld [vmem:[#allocation2] sm:$0xff]
        %v241 = vld [vmem:[#allocation2 + $0x8] sm:$0xff]
        %v242 = vld [vmem:[%s210] sm:$0xff]
        %v243 = vld [vmem:[%s210 + $0x8] sm:$0xff]
        %v244 = vld [vmem:[%s210 + $0x10] sm:$0xff]
        %v245 = vld [vmem:[%s210 + $0x18] sm:$0xff]
        %v246 = vld [vmem:[%s210 + $0x20] sm:$0xff]
        %v247 = vld [vmem:[%s210 + $0x28] sm:$0xff]
        %v248 = vld [vmem:[%s210 + $0x30] sm:$0xff]
        %v249 = vld [vmem:[%s210 + $0x38] sm:$0xff]
        %v250 = vld [vmem:[%s210 + $0x40] sm:$0xff]
        %v251 = vld [vmem:[%s210 + $0x48] sm:$0xff]
        %v252 = vld [vmem:[%s210 + $0x50] sm:$0xff]
        %v253 = vld [vmem:[%s210 + $0x58] sm:$0xff]
        %v254 = vld [vmem:[%s210 + $0x60] sm:$0xff]
        %v255 = vld [vmem:[%s210 + $0x68] sm:$0xff]
        %v256 = vld [vmem:[%s210 + $0x70] sm:$0xff]
        %v257 = vld [vmem:[%s210 + $0x78] sm:$0xff]
        %v258 = vld [vmem:[%s210 + $0x80] sm:$0xff]
        %v259 = vld [vmem:[%s210 + $0x88] sm:$0xff]
        %v260 = vld [vmem:[%s210 + $0x90] sm:$0xff]
        %v261 = vld [vmem:[%s210 + $0x98] sm:$0xff]
        %v262 = vld [vmem:[%s210 + $0xa0] sm:$0xff]
        %v263 = vld [vmem:[%s210 + $0xa8] sm:$0xff]
        %v264 = vld [vmem:[%s210 + $0xb0] sm:$0xff]
        %v265 = vld [vmem:[%s210 + $0xb8] sm:$0xff]
        %v266 = vld [vmem:[%s210 + $0xc0] sm:$0xff]
        %v267 = vld [vmem:[%s210 + $0xc8] sm:$0xff]
        %v268 = vld [vmem:[%s210 + $0xd0] sm:$0xff]
        %v269 = vld [vmem:[%s210 + $0xd8] sm:$0xff]
        %v270 = vld [vmem:[%s210 + $0xe0] sm:$0xff]
        %v271 = vld [vmem:[%s210 + $0xe8] sm:$0xff]
        %v272 = vld [vmem:[%s210 + $0xf0] sm:$0xff]
        %v273 = vld [vmem:[%s210 + $0xf8] sm:$0xff]
        %274 = vmatprep.subr.mxu0 %v243
        %275 = vmatpush1.xpose.msra.mxu0 %v242
        %276 = vmatprep.subr.mxu0 %v245
        %277 = vmatpush1.xpose.msra.mxu0 %v244
        %278 = vmatprep.subr.mxu0 %v247
        %279 = vmatpush1.xpose.msra.mxu0 %v246
        %280 = vmatprep.subr.mxu0 %v249
        %281 = vmatpush1.xpose.msra.mxu0 %v248
        %282 = vmatprep.subr.mxu0 %v251
        %283 = vmatpush1.xpose.msra.mxu0 %v250
        %284 = vmatprep.subr.mxu0 %v253
        %285 = vmatpush1.xpose.msra.mxu0 %v252
        %286 = vmatprep.subr.mxu0 %v255
        %287 = vmatpush1.xpose.msra.mxu0 %v254
        %288 = vmatprep.subr.mxu0 %v257
        %289 = vmatpush1.xpose.msra.mxu0 %v256
        %290 = vmatprep.subr.mxu0 %v259
        %291 = vmatpush1.xpose.msra.mxu0 %v258
        %292 = vmatprep.subr.mxu0 %v261
        %293 = vmatpush1.xpose.msra.mxu0 %v260
        %294 = vmatprep.subr.mxu0 %v263
        %295 = vmatpush1.xpose.msra.mxu0 %v262
        %296 = vmatprep.subr.mxu0 %v265
        %297 = vmatpush1.xpose.msra.mxu0 %v264
        %298 = vmatprep.subr.mxu0 %v267
        %299 = vmatpush1.xpose.msra.mxu0 %v266
        %300 = vmatprep.subr.mxu0 %v269
        %301 = vmatpush1.xpose.msra.mxu0 %v268
        %302 = vmatprep.subr.mxu0 %v271
        %303 = vmatpush1.xpose.msra.mxu0 %v270
        %304 = vmatprep.subr.mxu0 %v273
        %305 = vmatpush1.xpose.msra.mxu0 %v272
        %306 = vmatprep.subr.mxu0 0.0
        %307 = vmatpush1.xpose.msra.mxu0 0.0
        %308 = vmatprep.subr.mxu0 0.0
        %309 = vmatpush1.xpose.msra.mxu0 0.0
        %310 = vmatprep.subr.mxu0 0.0
        %311 = vmatpush1.xpose.msra.mxu0 0.0
        %312 = vmatprep.subr.mxu0 0.0
        %313 = vmatpush1.xpose.msra.mxu0 0.0
        %314 = vmatprep.subr.mxu0 0.0
        %315 = vmatpush1.xpose.msra.mxu0 0.0
        %316 = vmatprep.subr.mxu0 0.0
        %317 = vmatpush1.xpose.msra.mxu0 0.0
        %318 = vmatprep.subr.mxu0 0.0
        %319 = vmatpush1.xpose.msra.mxu0 0.0
        %320 = vmatprep.subr.mxu0 0.0
        %321 = vmatpush1.xpose.msra.mxu0 0.0
        %322 = vmatprep.subr.mxu0 0.0
        %323 = vmatpush1.xpose.msra.mxu0 0.0
        %324 = vmatprep.subr.mxu0 0.0
        %325 = vmatpush1.xpose.msra.mxu0 0.0
        %326 = vmatprep.subr.mxu0 0.0
        %327 = vmatpush1.xpose.msra.mxu0 0.0
        %328 = vmatprep.subr.mxu0 0.0
        %329 = vmatpush1.xpose.msra.mxu0 0.0
        %330 = vmatprep.subr.mxu0 0.0
        %331 = vmatpush1.xpose.msra.mxu0 0.0
        %332 = vmatprep.subr.mxu0 0.0
        %333 = vmatpush1.xpose.msra.mxu0 0.0
        %334 = vmatprep.subr.mxu0 0.0
        %335 = vmatpush1.xpose.msra.mxu0 0.0
        %336 = vmatprep.subr.mxu0 0.0
        %337 = vmatpush1.xpose.msra.mxu0 0.0
        %338 = vmatprep.mubr.f32.mxu0 %v241
        %339 = vmatmul.mubr.f32.gmra.mrb[0].mxu0 %v240
        %v340 = vpop.f32.mrb[0].mxu0
        %v341 = vadd.f32 0.0, %v340
        %v342 = vpop.f32.mrb[0].mxu0
        %343 = vdwg.mxu0
        %v344 = vmul.f32 %v341, 0.000625
        %v345 = vld [vmem:[%s239] sm:$0x1]
        %v347 = vlaneseq
        %v348 = vshrl.u32 %v347, 7
        %v349 = vsub.s32 0, %v348
        %v350 = vrot.slane %v345, %v349
        %v352 = vadd.f32 %v344, %v350
        %353 = vst [vmem:[%s235] sm:$0xff] %v352
        %s354 = sand.u32 %s121, 1
        %s355 = scalar_lea.sflag [#allocation4], %s354
        %s356 = sand.u32 %s121, 1
        %s357 = smul.addr %s356, 8
        %s358 = scalar_lea.vmem [#allocation7], %s357
        // Predicated region
        $region41: #{tpu_custom_call.1} parent=31 // pred_check
          %p359 = pneg %p131
        $region42: #{tpu_custom_call.1} parent=31 // pred_check_branch
          %361 = sbr.rel (%p359) target = $region44
        $region43: #{tpu_custom_call.1} parent=31 // pred_region
          %s363 = ssub.s32 128, 128
          %364 = vsyncadd %s355, %s363
          %s365 = smul.addr %s25, 3
          %s366 = sadd.s32 %s26, %s365
          %s367 = smul.addr %s366, 128
          %s368 = scalar_lea.hbm %s3, %s367
          %s370 = sshll.u32 %s358, 4
          %s371 = int_to_ptr.vmem [resolvable:$true] %s370
          %373 = dma.vmem_to_hbm [thread:$0]  %s371, 128, %s368, %s355
        $region44: #{tpu_custom_call.1} parent=31 // pred_fallthru
          _
      $region32: #{tpu_custom_call.1} parent=5 // pred_fallthru
        _
      %p374 = scmp.le.s32.totalorder 2, %s16
      // Predicated region
      $region45: #{tpu_custom_call.1} parent=5 // pred_check
        %p375 = pneg %p374
      $region46: #{tpu_custom_call.1} parent=5 // pred_check_branch
        %377 = sbr.rel (%p375) target = $region48
      $region47: #{tpu_custom_call.1} parent=5 // pred_region
        %s378 = ssub.s32 %s16, 2
        // Predicated region
        $region49: #{tpu_custom_call.1} parent=47 // pred_check
          %p379 = pneg %p137
        $region50: #{tpu_custom_call.1} parent=47 // pred_check_branch
          %381 = sbr.rel (%p379) target = $region52
        $region51: #{tpu_custom_call.1} parent=47 // pred_region
          %s382 = sand.u32 %s122, 1
          %s383 = scalar_lea.sflag [#allocation4], %s382
          %s384 = sand.u32 %s122, 1
          %s385 = smul.addr %s384, 8
          %s386 = scalar_lea.vmem [#allocation7], %s385
          %387 = dma.done %s383, 128
        $region52: #{tpu_custom_call.1} parent=47 // pred_fallthru
          _
      $region48: #{tpu_custom_call.1} parent=5 // pred_fallthru
        _
    $region6: #{tpu_custom_call.1} parent=1 // loop_footer
      %s20 = sadd.s32 1, %s16
    $region7: #{tpu_custom_call.1} parent=1 // loop_footer_branch
      %15 = sbr.rel target = $region3
    $region8: #{tpu_custom_call.1} parent=1 // loop_exit
      _
    %388 = vsyncpa [#allocation3], 1
    %s389 = scalar_lea.sflag [#allocation3], 1
    %390 = vsyncpa %s389, 1
    %391 = vsyncpa [#allocation6], 1
    %s392 = scalar_lea.sflag [#allocation6], 1
    %393 = vsyncpa %s392, 1
    %394 = vsyncpa [#allocation4], 1
    %s395 = scalar_lea.sflag [#allocation4], 1
    %396 = vsyncpa %s395, 1

</llo_original>
